<compile_context>
chip_gen: v7x
topology: tpu7x:2x2x1
jax: 0.10.0
libtpu: 0.0.40
codegen_flags: <defaults>
</compile_context>

<pallas_src>
import functools

import jax
import jax.numpy as jnp
from jax.experimental import pallas as pl
from jax.experimental.pallas import tpu as pltpu


N_TRACK = 10
N_WAYPOINTS = 3
HIDDEN = 20
IN_PER_SIDE = 2 * N_TRACK                 # 20 features per track boundary
IN_FEATURES = 2 * IN_PER_SIDE             # 40
OUT_FEATURES = N_WAYPOINTS * 2            # 6

LANE = 128                                # TPU lane width; batch tiles are multiples of this
PARAM_DTYPE = jnp.bfloat16                # weight / MXU dtype (float32 => exact mode)
DEFAULT_TILE_B = 8192                     # batch columns (lanes) per grid step


def _mlp_kernel(xT_ref, w1_ref, b1_ref, w2_ref, b2_ref, w3_ref, b3_ref, o_ref):
    """Feature-major MLP: every tensor is (features, batch_tile); batch fills the lanes."""
    cdt = w1_ref.dtype

    # fc1: (20, 40) @ (40, TB) -> (20, TB); f32 accumulate, f32 bias + ReLU.
    h1 = jnp.dot(w1_ref[...], xT_ref[...], preferred_element_type=jnp.float32) + b1_ref[...]
    h1 = jnp.maximum(h1, 0.0)

    # fc2: (20, 20) @ (20, TB) -> (20, TB)
    h2 = jnp.dot(w2_ref[...], h1.astype(cdt), preferred_element_type=jnp.float32) + b2_ref[...]
    h2 = jnp.maximum(h2, 0.0)

    # fc3: (6, 20) @ (20, TB) -> (6, TB); lane-dense output store.
    yT = jnp.dot(w3_ref[...], h2.astype(cdt), preferred_element_type=jnp.float32) + b3_ref[...]
    o_ref[...] = yT.astype(o_ref.dtype)


def _round_up(x, m):
    return ((x + m - 1) // m) * m


@functools.partial(jax.jit, static_argnames=("tile_b", "min_steps"))
def mlp_planner_forward(track_left, track_right, params, *,
                        tile_b=DEFAULT_TILE_B, min_steps=2):
    """track_left, track_right: (B, n_track, 2) -> (B, n_waypoints, 2) float32."""
    b = track_left.shape[0]
    cdt = params["w1"].dtype

    # torch.cat([left, right], dim=1).reshape(B, -1) == concat of the two flattened halves.
    x = jnp.concatenate(
        [track_left.reshape(b, IN_PER_SIDE), track_right.reshape(b, IN_PER_SIDE)], axis=1)
    # Feature-major: (40, B), batch in the lane axis. Cast to the compute dtype here so the
    # kernel reads bf16 (half the HBM bytes) and needs no per-step cast pass.
    xT = x.T.astype(cdt)

    # Batch tiling (lane axis): rebalance so the tail tile is never nearly empty, and use
    # >= min_steps grid steps for large batches so the "parallel" axis feeds both v7x TCs.
    n_steps = pl.cdiv(b, tile_b)
    if b >= min_steps * LANE:
        n_steps = max(n_steps, min_steps)
    tb = _round_up(pl.cdiv(b, n_steps), LANE)
    n_steps = pl.cdiv(b, tb)              # drop steps made redundant by lane rounding
    padded_b = n_steps * tb
    if padded_b != b:
        xT = jnp.pad(xT, ((0, 0), (0, padded_b - b)))

    def const_spec(shape):
        # Same block every grid step -> Pallas keeps it VMEM-resident (no re-DMA).
        return pl.BlockSpec(shape, lambda i: (0, 0))

    outT = pl.pallas_call(
        _mlp_kernel,
        out_shape=jax.ShapeDtypeStruct((OUT_FEATURES, padded_b), jnp.float32),
        grid=(n_steps,),
        in_specs=[
            pl.BlockSpec((IN_FEATURES, tb), lambda i: (0, i)),   # X^T column tile
            const_spec((HIDDEN, IN_FEATURES)),                   # W1 (out, in) - PyTorch layout
            const_spec((HIDDEN, 1)),                             # b1
            const_spec((HIDDEN, HIDDEN)),                        # W2
            const_spec((HIDDEN, 1)),                             # b2
            const_spec((OUT_FEATURES, HIDDEN)),                  # W3
            const_spec((OUT_FEATURES, 1)),                       # b3
        ],
        out_specs=pl.BlockSpec((OUT_FEATURES, tb), lambda i: (0, i)),
        compiler_params=pltpu.CompilerParams(
            dimension_semantics=("parallel",),    # shard the batch grid across TCs on v7x
            vmem_limit_bytes=32 * 1024 * 1024,    # explicit (covers v5e's 16 MiB default)
        ),
    )(xT, params["w1"], params["b1"], params["w2"], params["b2"],
      params["w3"], params["b3"])

    return outT[:, :b].T.reshape(b, N_WAYPOINTS, 2)


def init_params(key):
    """f32 master params mimicking nn.Linear default init; weights stored (out, in)."""
    def linear(key, fan_in, fan_out):
        kw, kb = jax.random.split(key)
        bound = float(fan_in) ** -0.5
        w = jax.random.uniform(kw, (fan_out, fan_in), jnp.float32, -bound, bound)
        b = jax.random.uniform(kb, (fan_out, 1), jnp.float32, -bound, bound)
        return w, b

    k1, k2, k3 = jax.random.split(key, 3)
    w1, b1 = linear(k1, IN_FEATURES, HIDDEN)
    w2, b2 = linear(k2, HIDDEN, HIDDEN)
    w3, b3 = linear(k3, HIDDEN, OUT_FEATURES)
    return {"w1": w1, "b1": b1, "w2": w2, "b2": b2, "w3": w3, "b3": b3}


def to_kernel_params(params, dtype=PARAM_DTYPE):
    """Cast weights to the kernel storage dtype; biases stay f32 (added post-matmul)."""
    casted = dict(params)
    for k in ("w1", "w2", "w3"):
        casted[k] = params[k].astype(dtype)
    return casted


def _reference_forward(track_left, track_right, params):
    """Pure-JAX mirror of the kernel (same dtype-cast points). With f32 params this is
    exactly the original PyTorch forward."""
    cdt = params["w1"].dtype
    f32 = jnp.float32
    hp = jax.lax.Precision.HIGHEST
    b = track_left.shape[0]

    x = jnp.concatenate(
        [track_left.reshape(b, -1), track_right.reshape(b, -1)], axis=1)
    x = x.astype(cdt).astype(f32)

    h1 = jnp.maximum(
        jnp.dot(x, params["w1"].astype(f32).T, precision=hp) + params["b1"].T, 0.0)
    h1 = h1.astype(cdt).astype(f32)
    h2 = jnp.maximum(
        jnp.dot(h1, params["w2"].astype(f32).T, precision=hp) + params["b2"].T, 0.0)
    h2 = h2.astype(cdt).astype(f32)
    y = jnp.dot(h2, params["w3"].astype(f32).T, precision=hp) + params["b3"].T
    return y.reshape(b, N_WAYPOINTS, 2)


if __name__ == "__main__":
    key = jax.random.PRNGKey(0)
    k_params, k_l1, k_r1, k_l2, k_r2 = jax.random.split(key, 5)

    params_f32 = init_params(k_params)
    params = to_kernel_params(params_f32)                      # bf16 weights (default mode)

    # --- test 1: spec-sized batch (B=2), single grid step ---
    B = 2
    tl = jax.random.normal(k_l1, (B, N_TRACK, 2), jnp.float32)
    tr = jax.random.normal(k_r1, (B, N_TRACK, 2), jnp.float32)
    out = jax.block_until_ready(mlp_planner_forward(tl, tr, params))
    assert out.shape == (B, N_WAYPOINTS, 2), out.shape
    ref_matched = _reference_forward(tl, tr, params)           # same cast points as kernel
    ref_f32 = _reference_forward(tl, tr, params_f32)           # original f32 PyTorch semantics
    assert jnp.allclose(out, ref_matched, atol=2e-3, rtol=2e-3), "mismatch vs matched reference"
    assert jnp.allclose(out, ref_f32, atol=5e-2, rtol=5e-2), "mismatch vs f32 reference"

    # --- test 2: multi-step grid with rebalanced tiling (B=300, tile_b=128 -> 3 steps) ---
    B2 = 300
    tl2 = jax.random.normal(k_l2, (B2, N_TRACK, 2), jnp.float32)
    tr2 = jax.random.normal(k_r2, (B2, N_TRACK, 2), jnp.float32)
    out2 = jax.block_until_ready(mlp_planner_forward(tl2, tr2, params, tile_b=128))
    assert out2.shape == (B2, N_WAYPOINTS, 2), out2.shape
    ref2 = _reference_forward(tl2, tr2, params)
    assert jnp.allclose(out2, ref2, atol=2e-3, rtol=2e-3), "mismatch vs matched reference (tiled)"

    # --- test 3: f32 "exact mode" params (no bf16 rounding of weights/activations) ---
    out3 = jax.block_until_ready(mlp_planner_forward(tl2, tr2, params_f32, tile_b=128))
    ref3 = _reference_forward(tl2, tr2, params_f32)
    assert jnp.allclose(out3, ref3, atol=2e-2, rtol=2e-2), "mismatch vs f32 reference (exact mode)"

    print("KERNEL_OK")
</pallas_src>

<mosaic_0001>
module attributes {stable_mosaic.version = 11 : i64} {
  func.func @_mlp_kernel(%arg0: i32, %arg1: memref<40x128xbf16, #tpu.memory_space<vmem>>, %arg2: memref<20x40xbf16, #tpu.memory_space<vmem>>, %arg3: memref<20x1xf32, #tpu.memory_space<vmem>>, %arg4: memref<20x20xbf16, #tpu.memory_space<vmem>>, %arg5: memref<20x1xf32, #tpu.memory_space<vmem>>, %arg6: memref<6x20xbf16, #tpu.memory_space<vmem>>, %arg7: memref<6x1xf32, #tpu.memory_space<vmem>>, %arg8: memref<6x128xf32, #tpu.memory_space<vmem>>) attributes {dimension_semantics = [#tpu.dimension_semantics<parallel>], iteration_bounds = array<i64: 1>, scalar_prefetch = 0 : i64, scratch_operands = 0 : i64, tpu.core_type = #tpu.core_type<tc>, window_params = [{transform_indices = @transform_0, window_bounds = array<i64: 40, 128>}, {pipeline_mode = #tpu.pipeline_mode<synchronous>, transform_indices = @transform_1, window_bounds = array<i64: 20, 40>}, {pipeline_mode = #tpu.pipeline_mode<synchronous>, transform_indices = @transform_2, window_bounds = array<i64: 20, 1>}, {pipeline_mode = #tpu.pipeline_mode<synchronous>, transform_indices = @transform_3, window_bounds = array<i64: 20, 20>}, {pipeline_mode = #tpu.pipeline_mode<synchronous>, transform_indices = @transform_4, window_bounds = array<i64: 20, 1>}, {pipeline_mode = #tpu.pipeline_mode<synchronous>, transform_indices = @transform_5, window_bounds = array<i64: 6, 20>}, {pipeline_mode = #tpu.pipeline_mode<synchronous>, transform_indices = @transform_6, window_bounds = array<i64: 6, 1>}, {transform_indices = @transform_7, window_bounds = array<i64: 6, 128>}]} {
    %c0 = arith.constant 0 : index
    %c0_0 = arith.constant 0 : index
    %0 = vector.load %arg2[%c0, %c0_0] : memref<20x40xbf16, #tpu.memory_space<vmem>>, vector<20x40xbf16>
    %c0_1 = arith.constant 0 : index
    %c0_2 = arith.constant 0 : index
    %1 = vector.load %arg1[%c0_1, %c0_2] : memref<40x128xbf16, #tpu.memory_space<vmem>>, vector<40x128xbf16>
    %cst = arith.constant dense<0.000000e+00> : vector<20x128xf32>
    %2 = tpu.matmul %0, %1, %cst {dimension_numbers = #tpu.dot_dimension_numbers<[1], [0], [0], [1], [0, 0, 1, 1], [], []>} : vector<20x40xbf16>, vector<40x128xbf16>, vector<20x128xf32> -> vector<20x128xf32>
    %c0_3 = arith.constant 0 : index
    %c0_4 = arith.constant 0 : index
    %3 = vector.load %arg3[%c0_3, %c0_4] : memref<20x1xf32, #tpu.memory_space<vmem>>, vector<20x1xf32>
    %4 = vector.broadcast %3 : vector<20x1xf32> to vector<20x128xf32>
    %5 = arith.addf %2, %4 : vector<20x128xf32>
    %cst_5 = arith.constant 0.000000e+00 : f32
    %6 = vector.broadcast %cst_5 : f32 to vector<20x128xf32>
    %7 = arith.maximumf %5, %6 : vector<20x128xf32>
    %c0_6 = arith.constant 0 : index
    %c0_7 = arith.constant 0 : index
    %8 = vector.load %arg4[%c0_6, %c0_7] : memref<20x20xbf16, #tpu.memory_space<vmem>>, vector<20x20xbf16>
    %9 = arith.truncf %7 : vector<20x128xf32> to vector<20x128xbf16>
    %cst_8 = arith.constant dense<0.000000e+00> : vector<20x128xf32>
    %10 = tpu.matmul %8, %9, %cst_8 {dimension_numbers = #tpu.dot_dimension_numbers<[1], [0], [0], [1], [0, 0, 1, 1], [], []>} : vector<20x20xbf16>, vector<20x128xbf16>, vector<20x128xf32> -> vector<20x128xf32>
    %c0_9 = arith.constant 0 : index
    %c0_10 = arith.constant 0 : index
    %11 = vector.load %arg5[%c0_9, %c0_10] : memref<20x1xf32, #tpu.memory_space<vmem>>, vector<20x1xf32>
    %12 = vector.broadcast %11 : vector<20x1xf32> to vector<20x128xf32>
    %13 = arith.addf %10, %12 : vector<20x128xf32>
    %cst_11 = arith.constant 0.000000e+00 : f32
    %14 = vector.broadcast %cst_11 : f32 to vector<20x128xf32>
    %15 = arith.maximumf %13, %14 : vector<20x128xf32>
    %c0_12 = arith.constant 0 : index
    %c0_13 = arith.constant 0 : index
    %16 = vector.load %arg6[%c0_12, %c0_13] : memref<6x20xbf16, #tpu.memory_space<vmem>>, vector<6x20xbf16>
    %17 = arith.truncf %15 : vector<20x128xf32> to vector<20x128xbf16>
    %cst_14 = arith.constant dense<0.000000e+00> : vector<6x128xf32>
    %18 = tpu.matmul %16, %17, %cst_14 {dimension_numbers = #tpu.dot_dimension_numbers<[1], [0], [0], [1], [0, 0, 1, 1], [], []>} : vector<6x20xbf16>, vector<20x128xbf16>, vector<6x128xf32> -> vector<6x128xf32>
    %c0_15 = arith.constant 0 : index
    %c0_16 = arith.constant 0 : index
    %19 = vector.load %arg7[%c0_15, %c0_16] : memref<6x1xf32, #tpu.memory_space<vmem>>, vector<6x1xf32>
    %20 = vector.broadcast %19 : vector<6x1xf32> to vector<6x128xf32>
    %21 = arith.addf %18, %20 : vector<6x128xf32>
    %c0_17 = arith.constant 0 : index
    %c0_18 = arith.constant 0 : index
    %22 = vector.load %arg8[%c0_17, %c0_18] : memref<6x128xf32, #tpu.memory_space<vmem>>, vector<6x128xf32>
    tpu.vector_store %arg8[%c0_17, %c0_18], %21 {strides = array<i32>} : memref<6x128xf32, #tpu.memory_space<vmem>>, vector<6x128xf32>,
    return
  }
  func.func @transform_0(%arg0: i32) -> (i32, i32) {
    %c0_i32 = arith.constant 0 : i32
    %c0_i32_0 = arith.constant 0 : i32
    return %c0_i32, %arg0 : i32, i32
  }
  func.func @transform_1(%arg0: i32) -> (i32, i32) {
    %c0_i32 = arith.constant 0 : i32
    %c0_i32_0 = arith.constant 0 : i32
    %c0_i32_1 = arith.constant 0 : i32
    return %c0_i32, %c0_i32_0 : i32, i32
  }
  func.func @transform_2(%arg0: i32) -> (i32, i32) {
    %c0_i32 = arith.constant 0 : i32
    %c0_i32_0 = arith.constant 0 : i32
    %c0_i32_1 = arith.constant 0 : i32
    return %c0_i32, %c0_i32_0 : i32, i32
  }
  func.func @transform_3(%arg0: i32) -> (i32, i32) {
    %c0_i32 = arith.constant 0 : i32
    %c0_i32_0 = arith.constant 0 : i32
    %c0_i32_1 = arith.constant 0 : i32
    return %c0_i32, %c0_i32_0 : i32, i32
  }
  func.func @transform_4(%arg0: i32) -> (i32, i32) {
    %c0_i32 = arith.constant 0 : i32
    %c0_i32_0 = arith.constant 0 : i32
    %c0_i32_1 = arith.constant 0 : i32
    return %c0_i32, %c0_i32_0 : i32, i32
  }
  func.func @transform_5(%arg0: i32) -> (i32, i32) {
    %c0_i32 = arith.constant 0 : i32
    %c0_i32_0 = arith.constant 0 : i32
    %c0_i32_1 = arith.constant 0 : i32
    return %c0_i32, %c0_i32_0 : i32, i32
  }
  func.func @transform_6(%arg0: i32) -> (i32, i32) {
    %c0_i32 = arith.constant 0 : i32
    %c0_i32_0 = arith.constant 0 : i32
    %c0_i32_1 = arith.constant 0 : i32
    return %c0_i32, %c0_i32_0 : i32, i32
  }
  func.func @transform_7(%arg0: i32) -> (i32, i32) {
    %c0_i32 = arith.constant 0 : i32
    %c0_i32_0 = arith.constant 0 : i32
    return %c0_i32, %arg0 : i32, i32
  }
}

</mosaic_0001>

<llo_original>
// kernel: mlp_planner_forward.1
$region0: #{mlp_planner_forward.1}
  #allocation0 [shape = 'u32[]', space=smem, size = 0x4, offset = 0x4, fixed_abs, tag = 'smem constant byte address 0x4 - core index']
  #allocation1 [shape = 'u32[144,128]{1,0:T(1,128)}', space=vmem, size = 0x12000, scoped, tag = 'internal scratch']
  %s0 = inlined_call_operand.vmem [shape: bf16[40,128], index: 0, kind: input, shape index: {}]
  %s1 = inlined_call_operand.vmem [shape: bf16[20,40], index: 1, kind: input, shape index: {}]
  %s2 = inlined_call_operand.vmem [shape: f32[20,1], index: 2, kind: input, shape index: {}]
  %s3 = inlined_call_operand.vmem [shape: bf16[20,20], index: 3, kind: input, shape index: {}]
  %s4 = inlined_call_operand.vmem [shape: f32[20,1], index: 4, kind: input, shape index: {}]
  %s5 = inlined_call_operand.vmem [shape: bf16[6,20], index: 5, kind: input, shape index: {}]
  %s6 = inlined_call_operand.vmem [shape: f32[6,1], index: 6, kind: input, shape index: {}]
  %s7 = inlined_call_operand.vmem [shape: f32[6,128], index: 7, kind: output, shape index: {}]
  %s8 = sld [smem:[#allocation0]]
  $region38: #{mlp_planner_forward.1} parent=0
    _
  %s10 = ssub.s32 1, %s8
  %s11 = scalar_select 0, %s10, %s8
  // Predicated region
  $region2: #{mlp_planner_forward.1} parent=0 // pred_check
    _
  $region3: #{mlp_planner_forward.1} parent=0 // pred_check_branch
    %13 = sbr.rel (0) target = $region5
  $region4: #{mlp_planner_forward.1} parent=0 // pred_region
    _
  $region5: #{mlp_planner_forward.1} parent=0 // pred_fallthru
    _
  // Predicated region
  $region6: #{mlp_planner_forward.1} parent=0 // pred_check
    _
  $region7: #{mlp_planner_forward.1} parent=0 // pred_check_branch
    %15 = sbr.rel (0) target = $region9
  $region8: #{mlp_planner_forward.1} parent=0 // pred_region
    _
  $region9: #{mlp_planner_forward.1} parent=0 // pred_fallthru
    _
  // Predicated region
  $region10: #{mlp_planner_forward.1} parent=0 // pred_check
    _
  $region11: #{mlp_planner_forward.1} parent=0 // pred_check_branch
    %17 = sbr.rel (0) target = $region13
  $region12: #{mlp_planner_forward.1} parent=0 // pred_region
    _
  $region13: #{mlp_planner_forward.1} parent=0 // pred_fallthru
    _
  // Predicated region
  $region14: #{mlp_planner_forward.1} parent=0 // pred_check
    _
  $region15: #{mlp_planner_forward.1} parent=0 // pred_check_branch
    %19 = sbr.rel (0) target = $region17
  $region16: #{mlp_planner_forward.1} parent=0 // pred_region
    _
  $region17: #{mlp_planner_forward.1} parent=0 // pred_fallthru
    _
  // Predicated region
  $region18: #{mlp_planner_forward.1} parent=0 // pred_check
    _
  $region19: #{mlp_planner_forward.1} parent=0 // pred_check_branch
    %21 = sbr.rel (0) target = $region21
  $region20: #{mlp_planner_forward.1} parent=0 // pred_region
    _
  $region21: #{mlp_planner_forward.1} parent=0 // pred_fallthru
    _
  // Predicated region
  $region22: #{mlp_planner_forward.1} parent=0 // pred_check
    _
  $region23: #{mlp_planner_forward.1} parent=0 // pred_check_branch
    %23 = sbr.rel (0) target = $region25
  $region24: #{mlp_planner_forward.1} parent=0 // pred_region
    _
  $region25: #{mlp_planner_forward.1} parent=0 // pred_fallthru
    _
  // Predicated region
  $region26: #{mlp_planner_forward.1} parent=0 // pred_check
    _
  $region27: #{mlp_planner_forward.1} parent=0 // pred_check_branch
    %25 = sbr.rel (0) target = $region29
  $region28: #{mlp_planner_forward.1} parent=0 // pred_region
    _
  $region29: #{mlp_planner_forward.1} parent=0 // pred_fallthru
    _
  %v27 = vld [vmem:[%s1] sm:$0xf]
  %v28 = vld [vmem:[%s1 + $0x4] sm:$0xf]
  %v29 = vld [vmem:[%s1 + $0x8] sm:$0x3]
  %v30 = vld [vmem:[%s0] sm:$0xf]
  %v31 = vld [vmem:[%s0 + $0x4] sm:$0xf]
  %v32 = vld [vmem:[%s0 + $0x8] sm:$0xf]
  %v33 = vld [vmem:[%s0 + $0xc] sm:$0xf]
  %v34 = vld [vmem:[%s0 + $0x10] sm:$0xf]
  %v35 = vld [vmem:[%s2] sm:$0xff]
  %v36 = vld [vmem:[%s2 + $0x8] sm:$0xff]
  %v37 = vld [vmem:[%s2 + $0x10] sm:$0xf]
  %39 = vset.pattern.permute.xlu0 0
  %40 = vperm.xlu0 %39, %v35
  %v41 = vpop.permute.xlu0 %40
  %44 = vset.pattern.permute.xlu0 0
  %45 = vperm.xlu0 %44, %v36
  %v46 = vpop.permute.xlu0 %45
  %49 = vset.pattern.permute.xlu0 0
  %50 = vperm.xlu0 %49, %v37
  %v51 = vpop.permute.xlu0 %50
  %v56 = vunpack.c.l.b16 %v27
  %v57 = vunpack.c.l.b16 %v28
  %v58 = vunpack.c.l.b16 %v29
  %v59 = vpack.c.b16 %v57, %v56
  %v60 = vpack.c.b16 %v58, %v58
  %v66 = vunpack.c.l.b16 %v30
  %v67 = vunpack.c.l.b16 %v31
  %v68 = vunpack.c.l.b16 %v32
  %v69 = vunpack.c.l.b16 %v33
  %v70 = vunpack.c.l.b16 %v34
  %v71 = vpack.c.b16 %v67, %v66
  %v72 = vpack.c.b16 %v69, %v68
  %v73 = vpack.c.b16 %v70, %v70
  %vm76 = vcmask 326656
  %v78 = vsel %vm76, %v59, 0
  %v81 = vsel %vm76, %v60, 0
  %vm83 = vcmask 1043456
  %v85 = vsel %vm83, %v73, 0
  %87 = vmatprep.subr.bf16.mxu0 0
  %88 = vmatpush1.bf16.msra.mxu0 %v71
  %89 = vmatprep.subr.bf16.mxu0 0
  %90 = vmatpush1.bf16.msra.mxu0 %v72
  %91 = vmatprep.subr.bf16.mxu0 0
  %92 = vmatpush1.bf16.msra.mxu0 %v85
  %93 = vmatprep.subr.bf16.mxu0 0
  %94 = vmatpush1.bf16.msra.mxu0 0
  %95 = vmatprep.subr.bf16.mxu0 0
  %96 = vmatpush1.bf16.msra.mxu0 0
  %97 = vmatprep.subr.bf16.mxu0 0
  %98 = vmatpush1.bf16.msra.mxu0 0
  %99 = vmatprep.subr.bf16.mxu0 0
  %100 = vmatpush1.bf16.msra.mxu0 0
  %101 = vmatprep.subr.bf16.mxu0 0
  %102 = vmatpush1.bf16.msra.mxu0 0
  %103 = vmatprep.subr.bf16.mxu0 0
  %104 = vmatpush1.bf16.msra.mxu0 0
  %105 = vmatprep.subr.bf16.mxu0 0
  %106 = vmatpush1.bf16.msra.mxu0 0
  %107 = vmatprep.subr.bf16.mxu0 0
  %108 = vmatpush1.bf16.msra.mxu0 0
  %109 = vmatprep.subr.bf16.mxu0 0
  %110 = vmatpush1.bf16.msra.mxu0 0
  %111 = vmatprep.subr.bf16.mxu0 0
  %112 = vmatpush1.bf16.msra.mxu0 0
  %113 = vmatprep.subr.bf16.mxu0 0
  %114 = vmatpush1.bf16.msra.mxu0 0
  %115 = vmatprep.subr.bf16.mxu0 0
  %116 = vmatpush1.bf16.msra.mxu0 0
  %117 = vmatprep.subr.bf16.mxu0 0
  %118 = vmatpush1.bf16.msra.mxu0 0
  %119 = vmatprep.mubr.bf16.mxu0 0
  %120 = vmatmul.mubr.bf16.gmra.mrb[0].mxu0 %v78
  %v121 = vpop.f32.mrb[0].mxu0
  %v122 = vadd.f32 %v41, %v121
  %v123 = vpop.f32.mrb[0].mxu0
  %v124 = vpop.f32.mrb[0].mxu0
  %v125 = vadd.f32 %v46, %v124
  %v126 = vpop.f32.mrb[0].mxu0
  %127 = vmatprep.mubr.bf16.mxu0 0
  %128 = vmatmul.mubr.bf16.gmra.mrb[0].mxu0 %v81
  %v129 = vpop.f32.mrb[0].mxu0
  %v130 = vadd.f32 %v51, %v129
  %v131 = vpop.f32.mrb[0].mxu0
  %v132 = vpop.f32.mrb[0].mxu0
  %v133 = vpop.f32.mrb[0].mxu0
  %134 = vdwg.mxu0
  %v135 = vmax.f32 %v122, 0.0
  %v136 = vmax.f32 %v125, 0.0
  %v137 = vmax.f32 %v130, 0.0
  %v138 = vld [vmem:[%s3] sm:$0xf]
  %v139 = vld [vmem:[%s3 + $0x4] sm:$0xf]
  %v140 = vld [vmem:[%s3 + $0x8] sm:$0x3]
  %v141 = vpack.c.bf16 %v136, %v135
  %v142 = vpack.c.bf16 %v137, %v137
  %v143 = vld [vmem:[%s4] sm:$0xff]
  %v144 = vld [vmem:[%s4 + $0x8] sm:$0xff]
  %v145 = vld [vmem:[%s4 + $0x10] sm:$0xf]
  %147 = vset.pattern.permute.xlu0 0
  %148 = vperm.xlu0 %147, %v143
  %v149 = vpop.permute.xlu0 %148
  %152 = vset.pattern.permute.xlu0 0
  %153 = vperm.xlu0 %152, %v144
  %v154 = vpop.permute.xlu0 %153
  %157 = vset.pattern.permute.xlu0 0
  %158 = vperm.xlu0 %157, %v145
  %v159 = vpop.permute.xlu0 %158
  %v164 = vunpack.c.l.b16 %v138
  %v165 = vunpack.c.l.b16 %v139
  %v166 = vunpack.c.l.b16 %v140
  %v167 = vpack.c.b16 %v165, %v164
  %v168 = vpack.c.b16 %v166, %v166
  %vm169 = vcmask 162816
  %v171 = vsel %vm169, %v167, 0
  %v174 = vsel %vm169, %v168, 0
  %vm176 = vcmask 1041408
  %v178 = vsel %vm176, %v142, 0
  %180 = vmatprep.subr.bf16.mxu0 0
  %181 = vmatpush1.bf16.msra.mxu0 %v141
  %182 = vmatprep.subr.bf16.mxu0 0
  %183 = vmatpush1.bf16.msra.mxu0 %v178
  %184 = vmatprep.subr.bf16.mxu0 0
  %185 = vmatpush1.bf16.msra.mxu0 0
  %186 = vmatprep.subr.bf16.mxu0 0
  %187 = vmatpush1.bf16.msra.mxu0 0
  %188 = vmatprep.subr.bf16.mxu0 0
  %189 = vmatpush1.bf16.msra.mxu0 0
  %190 = vmatprep.subr.bf16.mxu0 0
  %191 = vmatpush1.bf16.msra.mxu0 0
  %192 = vmatprep.subr.bf16.mxu0 0
  %193 = vmatpush1.bf16.msra.mxu0 0
  %194 = vmatprep.subr.bf16.mxu0 0
  %195 = vmatpush1.bf16.msra.mxu0 0
  %196 = vmatprep.subr.bf16.mxu0 0
  %197 = vmatpush1.bf16.msra.mxu0 0
  %198 = vmatprep.subr.bf16.mxu0 0
  %199 = vmatpush1.bf16.msra.mxu0 0
  %200 = vmatprep.subr.bf16.mxu0 0
  %201 = vmatpush1.bf16.msra.mxu0 0
  %202 = vmatprep.subr.bf16.mxu0 0
  %203 = vmatpush1.bf16.msra.mxu0 0
  %204 = vmatprep.subr.bf16.mxu0 0
  %205 = vmatpush1.bf16.msra.mxu0 0
  %206 = vmatprep.subr.bf16.mxu0 0
  %207 = vmatpush1.bf16.msra.mxu0 0
  %208 = vmatprep.subr.bf16.mxu0 0
  %209 = vmatpush1.bf16.msra.mxu0 0
  %210 = vmatprep.subr.bf16.mxu0 0
  %211 = vmatpush1.bf16.msra.mxu0 0
  %212 = vmatprep.mubr.bf16.mxu0 0
  %213 = vmatmul.mubr.bf16.gmra.mrb[0].mxu0 %v171
  %v214 = vpop.f32.mrb[0].mxu0
  %v215 = vadd.f32 %v149, %v214
  %v216 = vpop.f32.mrb[0].mxu0
  %v217 = vpop.f32.mrb[0].mxu0
  %v218 = vadd.f32 %v154, %v217
  %v219 = vpop.f32.mrb[0].mxu0
  %220 = vmatprep.mubr.bf16.mxu0 0
  %221 = vmatmul.mubr.bf16.gmra.mrb[0].mxu0 %v174
  %v222 = vpop.f32.mrb[0].mxu0
  %v223 = vadd.f32 %v159, %v222
  %v224 = vpop.f32.mrb[0].mxu0
  %v225 = vpop.f32.mrb[0].mxu0
  %v226 = vpop.f32.mrb[0].mxu0
  %227 = vdwg.mxu0
  %v228 = vmax.f32 %v215, 0.0
  %v229 = vmax.f32 %v218, 0.0
  %v230 = vmax.f32 %v223, 0.0
  %v231 = vld [vmem:[%s5] sm:$0x7]
  %v232 = vpack.c.bf16 %v229, %v228
  %v233 = vpack.c.bf16 %v230, %v230
  %v234 = vld [vmem:[%s6] sm:$0x3f]
  %236 = vset.pattern.permute.xlu0 0
  %237 = vperm.xlu0 %236, %v234
  %v238 = vpop.permute.xlu0 %237
  %v241 = vsel %vm169, %v231, 0
  %v244 = vsel %vm176, %v233, 0
  %246 = vmatprep.subr.bf16.mxu0 0
  %247 = vmatpush1.bf16.msra.mxu0 %v232
  %248 = vmatprep.subr.bf16.mxu0 0
  %249 = vmatpush1.bf16.msra.mxu0 %v244
  %250 = vmatprep.subr.bf16.mxu0 0
  %251 = vmatpush1.bf16.msra.mxu0 0
  %252 = vmatprep.subr.bf16.mxu0 0
  %253 = vmatpush1.bf16.msra.mxu0 0
  %254 = vmatprep.subr.bf16.mxu0 0
  %255 = vmatpush1.bf16.msra.mxu0 0
  %256 = vmatprep.subr.bf16.mxu0 0
  %257 = vmatpush1.bf16.msra.mxu0 0
  %258 = vmatprep.subr.bf16.mxu0 0
  %259 = vmatpush1.bf16.msra.mxu0 0
  %260 = vmatprep.subr.bf16.mxu0 0
  %261 = vmatpush1.bf16.msra.mxu0 0
  %262 = vmatprep.subr.bf16.mxu0 0
  %263 = vmatpush1.bf16.msra.mxu0 0
  %264 = vmatprep.subr.bf16.mxu0 0
  %265 = vmatpush1.bf16.msra.mxu0 0
  %266 = vmatprep.subr.bf16.mxu0 0
  %267 = vmatpush1.bf16.msra.mxu0 0
  %268 = vmatprep.subr.bf16.mxu0 0
  %269 = vmatpush1.bf16.msra.mxu0 0
  %270 = vmatprep.subr.bf16.mxu0 0
  %271 = vmatpush1.bf16.msra.mxu0 0
  %272 = vmatprep.subr.bf16.mxu0 0
  %273 = vmatpush1.bf16.msra.mxu0 0
  %274 = vmatprep.subr.bf16.mxu0 0
  %275 = vmatpush1.bf16.msra.mxu0 0
  %276 = vmatprep.subr.bf16.mxu0 0
  %277 = vmatpush1.bf16.msra.mxu0 0
  %278 = vmatprep.mubr.bf16.mxu0 0
  %279 = vmatmul.mubr.bf16.gmra.mrb[0].mxu0 %v241
  %v280 = vpop.f32.mrb[0].mxu0
  %v281 = vadd.f32 %v238, %v280
  %v282 = vpop.f32.mrb[0].mxu0
  %v283 = vpop.f32.mrb[0].mxu0
  %v284 = vpop.f32.mrb[0].mxu0
  %285 = vdwg.mxu0
  %286 = vst [vmem:[%s7] sm:$0x3f] %v281
  // Predicated region
  $region30: #{mlp_planner_forward.1} parent=0 // pred_check
    _
  $region31: #{mlp_planner_forward.1} parent=0 // pred_check_branch
    %288 = sbr.rel (0) target = $region33
  $region32: #{mlp_planner_forward.1} parent=0 // pred_region
    _
  $region33: #{mlp_planner_forward.1} parent=0 // pred_fallthru
    _
  // Predicated region
  $region34: #{mlp_planner_forward.1} parent=0 // pred_check
    _
  $region35: #{mlp_planner_forward.1} parent=0 // pred_check_branch
    %290 = sbr.rel (0) target = $region37
  $region36: #{mlp_planner_forward.1} parent=0 // pred_region
    _
  $region37: #{mlp_planner_forward.1} parent=0 // pred_fallthru
    _

</llo_original>
